<compile_context>
chip_gen: v7x
topology: tpu7x:2x2x1
jax: 0.10.0
libtpu: 0.0.40
codegen_flags: <defaults>
</compile_context>

<pallas_src>
import functools
import math

import jax
import jax.numpy as jnp
from jax import lax
from jax.experimental import pallas as pl
from jax.experimental.pallas import tpu as pltpu

_LANE = 128


def _round_up(v, m):
    return -(-v // m) * m


def _sublane_min(dtype):
    # Packed min-tile sublane count: f32 -> 8, bf16 -> 16, int8/fp8 -> 32.
    return max(8, 8 * (4 // max(jnp.dtype(dtype).itemsize, 1)))


@functools.lru_cache(maxsize=None)
def _gen_defaults():
    """Generation-aware tile presets and VMEM limit."""
    try:
        vmem = int(pltpu.get_tpu_info().vmem_capacity_bytes)
    except Exception:  # unknown chip -> conservative (v7x-safe) settings
        vmem = 64 << 20
    if vmem <= (64 << 20):
        # v7x-class: 64 MiB physical / 32 MiB scoped default.
        return {"tm": 512, "tn": 512, "tk": 512, "vmem_limit": 32 << 20}
    # v5e / v6e: 128 MiB VMEM -> larger output tiles for arithmetic intensity.
    return {"tm": 512, "tn": 1024, "tk": 1024, "vmem_limit": 64 << 20}


def _choose_tile(dim, pref, align, slack_num=1, slack_den=16):
    """Pick (tile, padded_dim): tile is a multiple of `align`, <= pref, and
    divides padded_dim.  Prefers the largest tile whose padding stays within
    `slack` (default 1/16) of the minimal (align-rounded) padding."""
    dim = max(int(dim), 1)
    min_pad = _round_up(dim, align)
    budget = min_pad + (min_pad * slack_num) // slack_den
    best_t, best_p = align, min_pad
    t = align
    cap = min(pref, min_pad)
    while t <= cap:
        p = _round_up(dim, t)
        if p <= budget:
            best_t, best_p = t, p
        t += align
    return best_t, best_p


def _make_kernel(has_bias, direct_acc, w_is_kn, precision):
    """Grid = (M/tm, N/tn, K/tk); K innermost ('arbitrary') reduction axis.

    w_is_kn=True:  weight block is (tk, tn) (pre-transposed, MXU-native).
    w_is_kn=False: weight block is (tn, tk) native layout, contracted on its
                   last dim (trans-B matmul) to avoid a wrapper transpose.
    """
    dn = (((1,), (0,)), ((), ())) if w_is_kn else (((1,), (1,)), ((), ()))

    def _mma(x_ref, w_ref):
        return lax.dot_general(
            x_ref[...], w_ref[...], dimension_numbers=dn,
            preferred_element_type=jnp.float32, precision=precision)

    if direct_acc:
        # float32 output: accumulate straight into the resident output block.
        if has_bias:
            def kernel(x_ref, w_ref, b_ref, o_ref):
                k = pl.program_id(2)
                acc = _mma(x_ref, w_ref)

                @pl.when(k == 0)
                def _():
                    # Fold zero-init and the bias add into the first K step.
                    o_ref[...] = acc + b_ref[...]

                @pl.when(k != 0)
                def _():
                    o_ref[...] += acc
        else:
            def kernel(x_ref, w_ref, o_ref):
                k = pl.program_id(2)
                acc = _mma(x_ref, w_ref)

                @pl.when(k == 0)
                def _():
                    o_ref[...] = acc

                @pl.when(k != 0)
                def _():
                    o_ref[...] += acc
    else:
        # Sub-f32 output dtype: keep a float32 accumulator scratch.
        if has_bias:
            def kernel(x_ref, w_ref, b_ref, o_ref, acc_ref):
                k = pl.program_id(2)
                acc = _mma(x_ref, w_ref)

                @pl.when(k == 0)
                def _():
                    acc_ref[...] = acc + b_ref[...]

                @pl.when(k != 0)
                def _():
                    acc_ref[...] += acc

                @pl.when(k == pl.num_programs(2) - 1)
                def _():
                    o_ref[...] = acc_ref[...].astype(o_ref.dtype)
        else:
            def kernel(x_ref, w_ref, o_ref, acc_ref):
                k = pl.program_id(2)
                acc = _mma(x_ref, w_ref)

                @pl.when(k == 0)
                def _():
                    acc_ref[...] = acc

                @pl.when(k != 0)
                def _():
                    acc_ref[...] += acc

                @pl.when(k == pl.num_programs(2) - 1)
                def _():
                    o_ref[...] = acc_ref[...].astype(o_ref.dtype)

    return kernel


def _rpl_matmul(x2, w, b2, *, tm, tn, tk, out_dtype, w_is_kn, vmem_limit):
    """Core pallas_call.

    x2:(Mp,Kp);  w:(Kp,Np) if w_is_kn else (Np,Kp);  b2:(1,Np) or None.
    All dims are tile-aligned (tm | Mp, tn | Np, tk | Kp).
    """
    Mp, Kp = x2.shape
    Np = w.shape[1] if w_is_kn else w.shape[0]
    assert Mp % tm == 0 and Np % tn == 0 and Kp % tk == 0, (Mp, Np, Kp, tm, tn, tk)

    # v7x has two TensorCores: if both "parallel" grid axes would have extent
    # 1, split N so both cores get work (one extra cheap step on 1-TC chips).
    if Mp // tm == 1 and Np // tn == 1 and Np >= 2 * _LANE:
        cand = (Np // 2) // _LANE * _LANE
        while cand >= _LANE and Np % cand != 0:
            cand -= _LANE
        if cand >= _LANE:
            tn = cand

    grid = (Mp // tm, Np // tn, Kp // tk)
    has_bias = b2 is not None
    direct_acc = jnp.dtype(out_dtype) == jnp.dtype(jnp.float32)
    precision = (lax.Precision.HIGHEST
                 if jnp.dtype(x2.dtype) == jnp.dtype(jnp.float32)
                 else lax.Precision.DEFAULT)

    if w_is_kn:
        w_spec = pl.BlockSpec((tk, tn), lambda i, j, k: (k, j))
    else:
        w_spec = pl.BlockSpec((tn, tk), lambda i, j, k: (j, k))
    in_specs = [pl.BlockSpec((tm, tk), lambda i, j, k: (i, k)), w_spec]
    operands = [x2, w]
    if has_bias:
        in_specs.append(pl.BlockSpec((1, tn), lambda i, j, k: (0, j)))
        operands.append(b2)

    scratch_shapes = [] if direct_acc else [pltpu.VMEM((tm, tn), jnp.float32)]

    itemsize_in = jnp.dtype(x2.dtype).itemsize
    bytes_accessed = ((x2.size + w.size) * itemsize_in
                      + Mp * Np * jnp.dtype(out_dtype).itemsize)
    if has_bias:
        bytes_accessed += b2.size * jnp.dtype(b2.dtype).itemsize

    return pl.pallas_call(
        _make_kernel(has_bias, direct_acc, w_is_kn, precision),
        out_shape=jax.ShapeDtypeStruct((Mp, Np), out_dtype),
        grid_spec=pltpu.PrefetchScalarGridSpec(
            num_scalar_prefetch=0,
            grid=grid,
            in_specs=in_specs,
            out_specs=pl.BlockSpec((tm, tn), lambda i, j, k: (i, j)),
            scratch_shapes=scratch_shapes,
        ),
        compiler_params=pltpu.CompilerParams(
            dimension_semantics=("parallel", "parallel", "arbitrary"),
            vmem_limit_bytes=vmem_limit),
        cost_estimate=pl.CostEstimate(
            flops=2 * Mp * Np * Kp,
            transcendentals=0,
            bytes_accessed=bytes_accessed),
    )(*operands)


def row_parallel_linear(x, weight, bias=None, *, tm=None, tn=None, tk=None,
                        compute_dtype=None):
    """y = x @ weight.T + bias.   x:(..., K), weight:(N, K), bias:(N,)|None.

    Functional path: weight kept in native (N, K) layout (trans-B matmul), so
    no per-call W.T materialization in HBM.
    """
    orig_shape = x.shape
    K = orig_shape[-1]
    N, Kw = weight.shape
    assert Kw == K, (Kw, K)
    M = int(math.prod(orig_shape[:-1]))

    out_dtype = x.dtype
    if compute_dtype is not None:
        x = x.astype(compute_dtype)
        weight = weight.astype(compute_dtype)

    cfg = _gen_defaults()
    m_align = _sublane_min(x.dtype)
    if tm is None:
        tm, Mp = _choose_tile(M, cfg["tm"], m_align)
    else:
        Mp = _round_up(max(M, 1), tm)
    if tn is None:
        tn, Np = _choose_tile(N, cfg["tn"], _LANE)
    else:
        Np = _round_up(N, tn)
    if tk is None:
        tk, Kp = _choose_tile(K, cfg["tk"], _LANE)
    else:
        Kp = _round_up(K, tk)

    x2 = x.reshape(M, K)
    if (Mp, Kp) != (M, K):
        x2 = jnp.pad(x2, ((0, Mp - M), (0, Kp - K)))
    w = weight
    if (Np, Kp) != (N, K):
        w = jnp.pad(w, ((0, Np - N), (0, Kp - K)))
    b2 = None
    if bias is not None:
        b2 = (bias if Np == N else jnp.pad(bias, (0, Np - N)))
        b2 = b2.astype(jnp.float32).reshape(1, Np)

    out = _rpl_matmul(x2, w, b2, tm=tm, tn=tn, tk=tk, out_dtype=out_dtype,
                      w_is_kn=False, vmem_limit=cfg["vmem_limit"])
    out = out[:M, :N]
    return out.reshape(*orig_shape[:-1], N)


class RowParallelLinearJax:
    """RowParallelLinear forward (tensor-parallel world_size == 1).

    TODO(synk): multi-device tensor-parallel scatter / all-reduce not modeled
    (world_size fixed to 1, so both collectives are identities).
    """

    def __init__(self, input_size, output_size, bias=True, compute_dtype=None):
        self.input_size = input_size
        self.output_size = output_size
        self.compute_dtype = compute_dtype
        # Matches torch init: init.constant_(weight, 1.0); bias.zero_()
        self.weight = jnp.ones((output_size, input_size), dtype=jnp.float32)
        self.bias = jnp.zeros((output_size,), dtype=jnp.float32) if bias else None

        cfg = _gen_defaults()
        self._vmem_limit = cfg["vmem_limit"]
        self._tm_pref = cfg["tm"]
        # Tight 128-aligned padding of N / K; tiles divide the padded dims.
        self._tn, self._Np = _choose_tile(output_size, cfg["tn"], _LANE)
        self._tk, self._Kp = _choose_tile(input_size, cfg["tk"], _LANE)

        # One-time layout prep: pad + pre-transpose the weight to (Kp, Np) so
        # the kernel runs an MXU-native matmul (no per-tile transpose stealing
        # the vector-extended slots) and per-call HBM work on W is zero.
        w = (self.weight if compute_dtype is None
             else self.weight.astype(compute_dtype))
        wp = jnp.pad(w, ((0, self._Np - output_size), (0, self._Kp - input_size)))
        self._weight_kn = jnp.asarray(wp.T)  # (Kp, Np)
        self._bias_p = (jnp.pad(self.bias, (0, self._Np - output_size))
                        .reshape(1, self._Np) if bias else None)

    def __call__(self, x):
        orig_shape = x.shape
        K = orig_shape[-1]
        assert K == self.input_size
        M = int(math.prod(orig_shape[:-1]))

        out_dtype = x.dtype
        if self.compute_dtype is not None:
            x = x.astype(self.compute_dtype)
        m_align = _sublane_min(x.dtype)
        tm, Mp = _choose_tile(M, self._tm_pref, m_align)

        x2 = x.reshape(M, K)
        if (Mp, self._Kp) != (M, K):
            x2 = jnp.pad(x2, ((0, Mp - M), (0, self._Kp - K)))

        out = _rpl_matmul(x2, self._weight_kn, self._bias_p,
                          tm=tm, tn=self._tn, tk=self._tk, out_dtype=out_dtype,
                          w_is_kn=True, vmem_limit=self._vmem_limit)
        out = out[:M, :self.output_size]
        return out.reshape(*orig_shape[:-1], self.output_size)


if __name__ == "__main__":
    batch, seq, in_features, out_features = 2, 8, 32, 48

    key = jax.random.PRNGKey(0)
    x = jax.random.normal(key, (batch, seq, in_features), dtype=jnp.float32)

    # Class path (pre-transposed persistent weight), bias=True.
    layer = RowParallelLinearJax(in_features, out_features, bias=True)
    y = jax.block_until_ready(layer(x))
    y_ref = jnp.einsum("bsk,nk->bsn", x, layer.weight) + layer.bias
    assert y.shape == (batch, seq, out_features), y.shape
    assert jnp.allclose(y, y_ref, atol=1e-4, rtol=1e-4), "class path mismatch"

    # Functional wrapper (native (N,K) / trans-B path), no bias.
    y2 = jax.block_until_ready(row_parallel_linear(x, layer.weight, None))
    assert jnp.allclose(y2, jnp.einsum("bsk,nk->bsn", x, layer.weight),
                        atol=1e-4, rtol=1e-4), "no-bias mismatch"

    # Random-weight functional check exercising non-aligned padding, a
    # multi-step K reduction (explicit tk=128) and bias-folded-into-k==0.
    k1, k2, k3 = jax.random.split(jax.random.PRNGKey(1), 3)
    xb = jax.random.normal(k1, (3, 5, 384), dtype=jnp.float32)
    wb = jax.random.normal(k2, (200, 384), dtype=jnp.float32) * 0.05
    bb = jax.random.normal(k3, (200,), dtype=jnp.float32)
    y3 = jax.block_until_ready(row_parallel_linear(xb, wb, bb, tk=128))
    y3_ref = jnp.einsum("bsk,nk->bsn", xb, wb) + bb
    assert jnp.allclose(y3, y3_ref, atol=5e-3, rtol=5e-3), "random-weight mismatch"

    print("KERNEL_OK")
</pallas_src>

<mosaic_0001>
module attributes {stable_mosaic.version = 11 : i64} {
  func.func @kernel(%arg0: i32, %arg1: i32, %arg2: i32, %arg3: memref<16x128xf32, #tpu.memory_space<vmem>>, %arg4: memref<128x128xf32, #tpu.memory_space<vmem>>, %arg5: memref<1x128xf32, #tpu.memory_space<vmem>>, %arg6: memref<16x128xf32, #tpu.memory_space<vmem>>) attributes {dimension_semantics = [#tpu.dimension_semantics<parallel>, #tpu.dimension_semantics<parallel>, #tpu.dimension_semantics<arbitrary>], iteration_bounds = array<i64: 1, 1, 1>, scalar_prefetch = 0 : i64, scratch_operands = 0 : i64, tpu.core_type = #tpu.core_type<tc>, window_params = [{transform_indices = @transform_0, window_bounds = array<i64: 16, 128>}, {transform_indices = @transform_1, window_bounds = array<i64: 128, 128>}, {transform_indices = @transform_2, window_bounds = array<i64: 1, 128>}, {transform_indices = @transform_3, window_bounds = array<i64: 16, 128>}]} {
    %c0 = arith.constant 0 : index
    %c0_0 = arith.constant 0 : index
    %0 = vector.load %arg3[%c0, %c0_0] : memref<16x128xf32, #tpu.memory_space<vmem>>, vector<16x128xf32>
    %c0_1 = arith.constant 0 : index
    %c0_2 = arith.constant 0 : index
    %1 = vector.load %arg4[%c0_1, %c0_2] : memref<128x128xf32, #tpu.memory_space<vmem>>, vector<128x128xf32>
    %cst = arith.constant dense<0.000000e+00> : vector<16x128xf32>
    %2 = tpu.matmul %0, %1, %cst {dimension_numbers = #tpu.dot_dimension_numbers<[1], [0], [0], [1], [0, 0, 1, 1], [], []>, precision = #tpu.contract_precision<fp32>} : vector<16x128xf32>, vector<128x128xf32>, vector<16x128xf32> -> vector<16x128xf32>
    %c0_i32 = arith.constant 0 : i32
    %3 = arith.cmpi eq, %arg2, %c0_i32 : i32
    %4 = arith.extui %3 : i1 to i32
    %c0_i32_3 = arith.constant 0 : i32
    %5 = arith.cmpi ne, %4, %c0_i32_3 : i32
    scf.if %5 {
      %c0_6 = arith.constant 0 : index
      %c0_7 = arith.constant 0 : index
      %9 = vector.load %arg5[%c0_6, %c0_7] : memref<1x128xf32, #tpu.memory_space<vmem>>, vector<1x128xf32>
      %10 = vector.broadcast %9 : vector<1x128xf32> to vector<16x128xf32>
      %11 = arith.addf %2, %10 : vector<16x128xf32>
      %c0_8 = arith.constant 0 : index
      %c0_9 = arith.constant 0 : index
      %12 = vector.load %arg6[%c0_8, %c0_9] : memref<16x128xf32, #tpu.memory_space<vmem>>, vector<16x128xf32>
      tpu.vector_store %arg6[%c0_8, %c0_9], %11 {strides = array<i32>} : memref<16x128xf32, #tpu.memory_space<vmem>>, vector<16x128xf32>,
    } else {
    }
    %c0_i32_4 = arith.constant 0 : i32
    %6 = arith.cmpi ne, %arg2, %c0_i32_4 : i32
    %7 = arith.extui %6 : i1 to i32
    %c0_i32_5 = arith.constant 0 : i32
    %8 = arith.cmpi ne, %7, %c0_i32_5 : i32
    scf.if %8 {
      %c0_6 = arith.constant 0 : index
      %c0_7 = arith.constant 0 : index
      %9 = vector.load %arg6[%c0_6, %c0_7] : memref<16x128xf32, #tpu.memory_space<vmem>>, vector<16x128xf32>
      %10 = arith.addf %9, %2 : vector<16x128xf32>
      %c0_8 = arith.constant 0 : index
      %c0_9 = arith.constant 0 : index
      %11 = vector.load %arg6[%c0_8, %c0_9] : memref<16x128xf32, #tpu.memory_space<vmem>>, vector<16x128xf32>
      tpu.vector_store %arg6[%c0_8, %c0_9], %10 {strides = array<i32>} : memref<16x128xf32, #tpu.memory_space<vmem>>, vector<16x128xf32>,
    } else {
    }
    return
  }
  func.func @transform_0(%arg0: i32, %arg1: i32, %arg2: i32) -> (i32, i32) {
    %c0_i32 = arith.constant 0 : i32
    return %arg0, %arg2 : i32, i32
  }
  func.func @transform_1(%arg0: i32, %arg1: i32, %arg2: i32) -> (i32, i32) {
    %c0_i32 = arith.constant 0 : i32
    return %arg2, %arg1 : i32, i32
  }
  func.func @transform_2(%arg0: i32, %arg1: i32, %arg2: i32) -> (i32, i32) {
    %c0_i32 = arith.constant 0 : i32
    %c0_i32_0 = arith.constant 0 : i32
    return %c0_i32, %arg1 : i32, i32
  }
  func.func @transform_3(%arg0: i32, %arg1: i32, %arg2: i32) -> (i32, i32) {
    %c0_i32 = arith.constant 0 : i32
    return %arg0, %arg1 : i32, i32
  }
}

</mosaic_0001>

<llo_original>
// kernel: tpu_custom_call.1
$region0: #{tpu_custom_call.1}
  #allocation0 [shape = 'u32[]', space=smem, size = 0x4, offset = 0x4, fixed_abs, tag = 'smem constant byte address 0x4 - core index']
  #allocation1 [shape = 'u32[144,128]{1,0:T(1,128)}', space=vmem, size = 0x12000, scoped, tag = 'internal scratch']
  %s0 = inlined_call_operand.hbm [shape: f32[16,128], index: 0, kind: input, shape index: {}]
  %s1 = inlined_call_operand.hbm [shape: f32[128,128], index: 1, kind: input, shape index: {}]
  %s2 = inlined_call_operand.vmem [shape: f32[1,128], index: 2, kind: input, shape index: {}]
  %s3 = inlined_call_operand.hbm [shape: f32[16,128], index: 3, kind: output, shape index: {}]
  %s4 = sld [smem:[#allocation0]]
  $region38: #{tpu_custom_call.1} parent=0
    _
  %s6 = ssub.s32 1, %s4
  %s7 = scalar_select 0, %s6, %s4
  $region1: #{tpu_custom_call.1} parent=0
    #allocation2 [shape = 'u8[8192]{0}', space=vmem, size = 0x2000, scoped, tag = 'input window, operand 0, single buffered']
    #allocation3 [shape = 's32[1]{0}', space=sflag, size = 0x4, scoped, tag = 'scoped memory for tpu_custom_call.1']
    #allocation4 [shape = 's32[1]{0}', space=sflag, size = 0x4, scoped, tag = 'scoped memory for tpu_custom_call.1']
    #allocation5 [shape = 'u8[65536]{0}', space=vmem, size = 0x10000, scoped, tag = 'input window, operand 1, single buffered']
    #allocation6 [shape = 's32[1]{0}', space=sflag, size = 0x4, scoped, tag = 'scoped memory for tpu_custom_call.1']
    #allocation7 [shape = 'u8[8192]{0}', space=vmem, size = 0x2000, scoped, tag = 'output window, operand 0, single buffered']
    %8 = vsyncpa [#allocation3], 0
    %9 = vsyncpa [#allocation6], 0
    %10 = vsyncpa [#allocation4], 0
    // Predicated region
    $region2: #{tpu_custom_call.1} parent=1 // pred_check
      _
    $region3: #{tpu_custom_call.1} parent=1 // pred_check_branch
      %12 = sbr.rel (0) target = $region5
    $region4: #{tpu_custom_call.1} parent=1 // pred_region
      %s14 = ssub.s32 256, 256
      %15 = vsyncadd [#allocation3], %s14
      %s16 = sshll.u32 [#allocation2], 4
      %s17 = int_to_ptr.vmem [resolvable:$true] %s16
      %22 = dma.hbm_to_vmem [thread:$0]  %s0, 256, %s17, [#allocation3], 128, 128, 8
    $region5: #{tpu_custom_call.1} parent=1 // pred_fallthru
      _
    // Predicated region
    $region6: #{tpu_custom_call.1} parent=1 // pred_check
      _
    $region7: #{tpu_custom_call.1} parent=1 // pred_check_branch
      %24 = sbr.rel (0) target = $region9
    $region8: #{tpu_custom_call.1} parent=1 // pred_region
      %s26 = ssub.s32 2048, 2048
      %27 = vsyncadd [#allocation6], %s26
      %s28 = sshll.u32 [#allocation5], 4
      %s29 = int_to_ptr.vmem [resolvable:$true] %s28
      %34 = dma.hbm_to_vmem [thread:$0]  %s1, 2048, %s29, [#allocation6], 128, 128, 8
    $region9: #{tpu_custom_call.1} parent=1 // pred_fallthru
      _
    // Predicated region
    $region10: #{tpu_custom_call.1} parent=1 // pred_check
      _
    $region11: #{tpu_custom_call.1} parent=1 // pred_check_branch
      %36 = sbr.rel (0) target = $region13
    $region12: #{tpu_custom_call.1} parent=1 // pred_region
      _
    $region13: #{tpu_custom_call.1} parent=1 // pred_fallthru
      _
    // Predicated region
    $region14: #{tpu_custom_call.1} parent=1 // pred_check
      _
    $region15: #{tpu_custom_call.1} parent=1 // pred_check_branch
      %38 = sbr.rel (0) target = $region17
    $region16: #{tpu_custom_call.1} parent=1 // pred_region
      %39 = dma.done [#allocation3], 256
    $region17: #{tpu_custom_call.1} parent=1 // pred_fallthru
      _
    // Predicated region
    $region18: #{tpu_custom_call.1} parent=1 // pred_check
      _
    $region19: #{tpu_custom_call.1} parent=1 // pred_check_branch
      %41 = sbr.rel (0) target = $region21
    $region20: #{tpu_custom_call.1} parent=1 // pred_region
      %42 = dma.done [#allocation6], 2048
    $region21: #{tpu_custom_call.1} parent=1 // pred_fallthru
      _
    %v43 = vld [vmem:[#allocation2] sm:$0xff]
    %v44 = vld [vmem:[#allocation2 + $0x8] sm:$0xff]
    %v45 = vld [vmem:[#allocation5] sm:$0xff]
    %v46 = vld [vmem:[#allocation5 + $0x8] sm:$0xff]
    %v47 = vld [vmem:[#allocation5 + $0x10] sm:$0xff]
    %v48 = vld [vmem:[#allocation5 + $0x18] sm:$0xff]
    %v49 = vld [vmem:[#allocation5 + $0x20] sm:$0xff]
    %v50 = vld [vmem:[#allocation5 + $0x28] sm:$0xff]
    %v51 = vld [vmem:[#allocation5 + $0x30] sm:$0xff]
    %v52 = vld [vmem:[#allocation5 + $0x38] sm:$0xff]
    %v53 = vld [vmem:[#allocation5 + $0x40] sm:$0xff]
    %v54 = vld [vmem:[#allocation5 + $0x48] sm:$0xff]
    %v55 = vld [vmem:[#allocation5 + $0x50] sm:$0xff]
    %v56 = vld [vmem:[#allocation5 + $0x58] sm:$0xff]
    %v57 = vld [vmem:[#allocation5 + $0x60] sm:$0xff]
    %v58 = vld [vmem:[#allocation5 + $0x68] sm:$0xff]
    %v59 = vld [vmem:[#allocation5 + $0x70] sm:$0xff]
    %v60 = vld [vmem:[#allocation5 + $0x78] sm:$0xff]
    %61 = vmatprep.subr.mxu0 0.0
    %v62 = vand.u32 %v45, 4294901760
    %63 = vmatpush1.msra.mxu0 %v62
    %64 = vmatprep.subr.mxu0 0.0
    %v65 = vand.u32 %v46, 4294901760
    %66 = vmatpush1.msra.mxu0 %v65
    %67 = vmatprep.subr.mxu0 0.0
    %v68 = vand.u32 %v47, 4294901760
    %69 = vmatpush1.msra.mxu0 %v68
    %70 = vmatprep.subr.mxu0 0.0
    %v71 = vand.u32 %v48, 4294901760
    %72 = vmatpush1.msra.mxu0 %v71
    %73 = vmatprep.subr.mxu0 0.0
    %v74 = vand.u32 %v49, 4294901760
    %75 = vmatpush1.msra.mxu0 %v74
    %76 = vmatprep.subr.mxu0 0.0
    %v77 = vand.u32 %v50, 4294901760
    %78 = vmatpush1.msra.mxu0 %v77
    %79 = vmatprep.subr.mxu0 0.0
    %v80 = vand.u32 %v51, 4294901760
    %81 = vmatpush1.msra.mxu0 %v80
    %82 = vmatprep.subr.mxu0 0.0
    %v83 = vand.u32 %v52, 4294901760
    %84 = vmatpush1.msra.mxu0 %v83
    %85 = vmatprep.subr.mxu0 0.0
    %v86 = vand.u32 %v53, 4294901760
    %87 = vmatpush1.msra.mxu0 %v86
    %88 = vmatprep.subr.mxu0 0.0
    %v89 = vand.u32 %v54, 4294901760
    %90 = vmatpush1.msra.mxu0 %v89
    %91 = vmatprep.subr.mxu0 0.0
    %v92 = vand.u32 %v55, 4294901760
    %93 = vmatpush1.msra.mxu0 %v92
    %94 = vmatprep.subr.mxu0 0.0
    %v95 = vand.u32 %v56, 4294901760
    %96 = vmatpush1.msra.mxu0 %v95
    %97 = vmatprep.subr.mxu0 0.0
    %v98 = vand.u32 %v57, 4294901760
    %99 = vmatpush1.msra.mxu0 %v98
    %100 = vmatprep.subr.mxu0 0.0
    %v101 = vand.u32 %v58, 4294901760
    %102 = vmatpush1.msra.mxu0 %v101
    %103 = vmatprep.subr.mxu0 0.0
    %v104 = vand.u32 %v59, 4294901760
    %105 = vmatpush1.msra.mxu0 %v104
    %106 = vmatprep.subr.mxu0 0.0
    %v107 = vand.u32 %v60, 4294901760
    %108 = vmatpush1.msra.mxu0 %v107
    %109 = vmatprep.subr.mxu0 0.0
    %110 = vmatpush1.msra.mxu0 0.0
    %111 = vmatprep.subr.mxu0 0.0
    %112 = vmatpush1.msra.mxu0 0.0
    %113 = vmatprep.subr.mxu0 0.0
    %114 = vmatpush1.msra.mxu0 0.0
    %115 = vmatprep.subr.mxu0 0.0
    %116 = vmatpush1.msra.mxu0 0.0
    %117 = vmatprep.subr.mxu0 0.0
    %118 = vmatpush1.msra.mxu0 0.0
    %119 = vmatprep.subr.mxu0 0.0
    %120 = vmatpush1.msra.mxu0 0.0
    %121 = vmatprep.subr.mxu0 0.0
    %122 = vmatpush1.msra.mxu0 0.0
    %123 = vmatprep.subr.mxu0 0.0
    %124 = vmatpush1.msra.mxu0 0.0
    %125 = vmatprep.subr.mxu0 0.0
    %126 = vmatpush1.msra.mxu0 0.0
    %127 = vmatprep.subr.mxu0 0.0
    %128 = vmatpush1.msra.mxu0 0.0
    %129 = vmatprep.subr.mxu0 0.0
    %130 = vmatpush1.msra.mxu0 0.0
    %131 = vmatprep.subr.mxu0 0.0
    %132 = vmatpush1.msra.mxu0 0.0
    %133 = vmatprep.subr.mxu0 0.0
    %134 = vmatpush1.msra.mxu0 0.0
    %135 = vmatprep.subr.mxu0 0.0
    %136 = vmatpush1.msra.mxu0 0.0
    %137 = vmatprep.subr.mxu0 0.0
    %138 = vmatpush1.msra.mxu0 0.0
    %139 = vmatprep.subr.mxu0 0.0
    %140 = vmatpush1.msra.mxu0 0.0
    %141 = vmatprep.mubr.f32.mxu0 0.0
    %v142 = vand.u32 %v43, 4294901760
    %v143 = vsub.f32 %v43, %v142
    %v144 = vand.u32 %v143, 4294901760
    %v145 = vsub.f32 %v143, %v144
    %v146 = vand.u32 %v145, 4294901760
    %147 = vmatmul.mubr.f32.gmra.mrb[0].mxu0 %v146
    %v148 = vpop.f32.mrb[0].mxu0
    %v149 = vadd.f32 0.0, %v148
    %v150 = vpop.f32.mrb[0].mxu0
    %151 = vmatprep.mubr.f32.mxu0 0.0
    %v152 = vand.u32 %v44, 4294901760
    %v153 = vsub.f32 %v44, %v152
    %v154 = vand.u32 %v153, 4294901760
    %v155 = vsub.f32 %v153, %v154
    %v156 = vand.u32 %v155, 4294901760
    %157 = vmatmul.mubr.f32.gmra.mrb[0].mxu0 %v156
    %v158 = vpop.f32.mrb[0].mxu0
    %v159 = vadd.f32 0.0, %v158
    %v160 = vpop.f32.mrb[0].mxu0
    %161 = vdwg.mxu0
    %162 = vmatprep.subr.mxu0 0.0
    %v163 = vand.u32 %v45, 4294901760
    %v164 = vsub.f32 %v45, %v163
    %v165 = vand.u32 %v164, 4294901760
    %v166 = vsub.f32 %v164, %v165
    %v167 = vand.u32 %v166, 4294901760
    %168 = vmatpush1.msra.mxu0 %v167
    %169 = vmatprep.subr.mxu0 0.0
    %v170 = vand.u32 %v46, 4294901760
    %v171 = vsub.f32 %v46, %v170
    %v172 = vand.u32 %v171, 4294901760
    %v173 = vsub.f32 %v171, %v172
    %v174 = vand.u32 %v173, 4294901760
    %175 = vmatpush1.msra.mxu0 %v174
    %176 = vmatprep.subr.mxu0 0.0
    %v177 = vand.u32 %v47, 4294901760
    %v178 = vsub.f32 %v47, %v177
    %v179 = vand.u32 %v178, 4294901760
    %v180 = vsub.f32 %v178, %v179
    %v181 = vand.u32 %v180, 4294901760
    %182 = vmatpush1.msra.mxu0 %v181
    %183 = vmatprep.subr.mxu0 0.0
    %v184 = vand.u32 %v48, 4294901760
    %v185 = vsub.f32 %v48, %v184
    %v186 = vand.u32 %v185, 4294901760
    %v187 = vsub.f32 %v185, %v186
    %v188 = vand.u32 %v187, 4294901760
    %189 = vmatpush1.msra.mxu0 %v188
    %190 = vmatprep.subr.mxu0 0.0
    %v191 = vand.u32 %v49, 4294901760
    %v192 = vsub.f32 %v49, %v191
    %v193 = vand.u32 %v192, 4294901760
    %v194 = vsub.f32 %v192, %v193
    %v195 = vand.u32 %v194, 4294901760
    %196 = vmatpush1.msra.mxu0 %v195
    %197 = vmatprep.subr.mxu0 0.0
    %v198 = vand.u32 %v50, 4294901760
    %v199 = vsub.f32 %v50, %v198
    %v200 = vand.u32 %v199, 4294901760
    %v201 = vsub.f32 %v199, %v200
    %v202 = vand.u32 %v201, 4294901760
    %203 = vmatpush1.msra.mxu0 %v202
    %204 = vmatprep.subr.mxu0 0.0
    %v205 = vand.u32 %v51, 4294901760
    %v206 = vsub.f32 %v51, %v205
    %v207 = vand.u32 %v206, 4294901760
    %v208 = vsub.f32 %v206, %v207
    %v209 = vand.u32 %v208, 4294901760
    %210 = vmatpush1.msra.mxu0 %v209
    %211 = vmatprep.subr.mxu0 0.0
    %v212 = vand.u32 %v52, 4294901760
    %v213 = vsub.f32 %v52, %v212
    %v214 = vand.u32 %v213, 4294901760
    %v215 = vsub.f32 %v213, %v214
    %v216 = vand.u32 %v215, 4294901760
    %217 = vmatpush1.msra.mxu0 %v216
    %218 = vmatprep.subr.mxu0 0.0
    %v219 = vand.u32 %v53, 4294901760
    %v220 = vsub.f32 %v53, %v219
    %v221 = vand.u32 %v220, 4294901760
    %v222 = vsub.f32 %v220, %v221
    %v223 = vand.u32 %v222, 4294901760
    %224 = vmatpush1.msra.mxu0 %v223
    %225 = vmatprep.subr.mxu0 0.0
    %v226 = vand.u32 %v54, 4294901760
    %v227 = vsub.f32 %v54, %v226
    %v228 = vand.u32 %v227, 4294901760
    %v229 = vsub.f32 %v227, %v228
    %v230 = vand.u32 %v229, 4294901760
    %231 = vmatpush1.msra.mxu0 %v230
    %232 = vmatprep.subr.mxu0 0.0
    %v233 = vand.u32 %v55, 4294901760
    %v234 = vsub.f32 %v55, %v233
    %v235 = vand.u32 %v234, 4294901760
    %v236 = vsub.f32 %v234, %v235
    %v237 = vand.u32 %v236, 4294901760
    %238 = vmatpush1.msra.mxu0 %v237
    %239 = vmatprep.subr.mxu0 0.0
    %v240 = vand.u32 %v56, 4294901760
    %v241 = vsub.f32 %v56, %v240
    %v242 = vand.u32 %v241, 4294901760
    %v243 = vsub.f32 %v241, %v242
    %v244 = vand.u32 %v243, 4294901760
    %245 = vmatpush1.msra.mxu0 %v244
    %246 = vmatprep.subr.mxu0 0.0
    %v247 = vand.u32 %v57, 4294901760
    %v248 = vsub.f32 %v57, %v247
    %v249 = vand.u32 %v248, 4294901760
    %v250 = vsub.f32 %v248, %v249
    %v251 = vand.u32 %v250, 4294901760
    %252 = vmatpush1.msra.mxu0 %v251
    %253 = vmatprep.subr.mxu0 0.0
    %v254 = vand.u32 %v58, 4294901760
    %v255 = vsub.f32 %v58, %v254
    %v256 = vand.u32 %v255, 4294901760
    %v257 = vsub.f32 %v255, %v256
    %v258 = vand.u32 %v257, 4294901760
    %259 = vmatpush1.msra.mxu0 %v258
    %260 = vmatprep.subr.mxu0 0.0
    %v261 = vand.u32 %v59, 4294901760
    %v262 = vsub.f32 %v59, %v261
    %v263 = vand.u32 %v262, 4294901760
    %v264 = vsub.f32 %v262, %v263
    %v265 = vand.u32 %v264, 4294901760
    %266 = vmatpush1.msra.mxu0 %v265
    %267 = vmatprep.subr.mxu0 0.0
    %v268 = vand.u32 %v60, 4294901760
    %v269 = vsub.f32 %v60, %v268
    %v270 = vand.u32 %v269, 4294901760
    %v271 = vsub.f32 %v269, %v270
    %v272 = vand.u32 %v271, 4294901760
    %273 = vmatpush1.msra.mxu0 %v272
    %274 = vmatprep.subr.mxu0 0.0
    %275 = vmatpush1.msra.mxu0 0.0
    %276 = vmatprep.subr.mxu0 0.0
    %277 = vmatpush1.msra.mxu0 0.0
    %278 = vmatprep.subr.mxu0 0.0
    %279 = vmatpush1.msra.mxu0 0.0
    %280 = vmatprep.subr.mxu0 0.0
    %281 = vmatpush1.msra.mxu0 0.0
    %282 = vmatprep.subr.mxu0 0.0
    %283 = vmatpush1.msra.mxu0 0.0
    %284 = vmatprep.subr.mxu0 0.0
    %285 = vmatpush1.msra.mxu0 0.0
    %286 = vmatprep.subr.mxu0 0.0
    %287 = vmatpush1.msra.mxu0 0.0
    %288 = vmatprep.subr.mxu0 0.0
    %289 = vmatpush1.msra.mxu0 0.0
    %290 = vmatprep.subr.mxu0 0.0
    %291 = vmatpush1.msra.mxu0 0.0
    %292 = vmatprep.subr.mxu0 0.0
    %293 = vmatpush1.msra.mxu0 0.0
    %294 = vmatprep.subr.mxu0 0.0
    %295 = vmatpush1.msra.mxu0 0.0
    %296 = vmatprep.subr.mxu0 0.0
    %297 = vmatpush1.msra.mxu0 0.0
    %298 = vmatprep.subr.mxu0 0.0
    %299 = vmatpush1.msra.mxu0 0.0
    %300 = vmatprep.subr.mxu0 0.0
    %301 = vmatpush1.msra.mxu0 0.0
    %302 = vmatprep.subr.mxu0 0.0
    %303 = vmatpush1.msra.mxu0 0.0
    %304 = vmatprep.subr.mxu0 0.0
    %305 = vmatpush1.msra.mxu0 0.0
    %306 = vmatprep.mubr.f32.mxu0 0.0
    %v307 = vand.u32 %v43, 4294901760
    %308 = vmatmul.mubr.f32.gmra.mrb[0].mxu0 %v307
    %v309 = vpop.f32.mrb[0].mxu0
    %v310 = vadd.f32 %v149, %v309
    %v311 = vpop.f32.mrb[0].mxu0
    %312 = vmatprep.mubr.f32.mxu0 0.0
    %v313 = vand.u32 %v44, 4294901760
    %314 = vmatmul.mubr.f32.gmra.mrb[0].mxu0 %v313
    %v315 = vpop.f32.mrb[0].mxu0
    %v316 = vadd.f32 %v159, %v315
    %v317 = vpop.f32.mrb[0].mxu0
    %318 = vdwg.mxu0
    %319 = vmatprep.subr.mxu0 0.0
    %v320 = vand.u32 %v45, 4294901760
    %v321 = vsub.f32 %v45, %v320
    %322 = vmatpush1.msra.mxu0 %v321
    %323 = vmatprep.subr.mxu0 0.0
    %v324 = vand.u32 %v46, 4294901760
    %v325 = vsub.f32 %v46, %v324
    %326 = vmatpush1.msra.mxu0 %v325
    %327 = vmatprep.subr.mxu0 0.0
    %v328 = vand.u32 %v47, 4294901760
    %v329 = vsub.f32 %v47, %v328
    %330 = vmatpush1.msra.mxu0 %v329
    %331 = vmatprep.subr.mxu0 0.0
    %v332 = vand.u32 %v48, 4294901760
    %v333 = vsub.f32 %v48, %v332
    %334 = vmatpush1.msra.mxu0 %v333
    %335 = vmatprep.subr.mxu0 0.0
    %v336 = vand.u32 %v49, 4294901760
    %v337 = vsub.f32 %v49, %v336
    %338 = vmatpush1.msra.mxu0 %v337
    %339 = vmatprep.subr.mxu0 0.0
    %v340 = vand.u32 %v50, 4294901760
    %v341 = vsub.f32 %v50, %v340
    %342 = vmatpush1.msra.mxu0 %v341
    %343 = vmatprep.subr.mxu0 0.0
    %v344 = vand.u32 %v51, 4294901760
    %v345 = vsub.f32 %v51, %v344
    %346 = vmatpush1.msra.mxu0 %v345
    %347 = vmatprep.subr.mxu0 0.0
    %v348 = vand.u32 %v52, 4294901760
    %v349 = vsub.f32 %v52, %v348
    %350 = vmatpush1.msra.mxu0 %v349
    %351 = vmatprep.subr.mxu0 0.0
    %v352 = vand.u32 %v53, 4294901760
    %v353 = vsub.f32 %v53, %v352
    %354 = vmatpush1.msra.mxu0 %v353
    %355 = vmatprep.subr.mxu0 0.0
    %v356 = vand.u32 %v54, 4294901760
    %v357 = vsub.f32 %v54, %v356
    %358 = vmatpush1.msra.mxu0 %v357
    %359 = vmatprep.subr.mxu0 0.0
    %v360 = vand.u32 %v55, 4294901760
    %v361 = vsub.f32 %v55, %v360
    %362 = vmatpush1.msra.mxu0 %v361
    %363 = vmatprep.subr.mxu0 0.0
    %v364 = vand.u32 %v56, 4294901760
    %v365 = vsub.f32 %v56, %v364
    %366 = vmatpush1.msra.mxu0 %v365
    %367 = vmatprep.subr.mxu0 0.0
    %v368 = vand.u32 %v57, 4294901760
    %v369 = vsub.f32 %v57, %v368
    %370 = vmatpush1.msra.mxu0 %v369
    %371 = vmatprep.subr.mxu0 0.0
    %v372 = vand.u32 %v58, 4294901760
    %v373 = vsub.f32 %v58, %v372
    %374 = vmatpush1.msra.mxu0 %v373
    %375 = vmatprep.subr.mxu0 0.0
    %v376 = vand.u32 %v59, 4294901760
    %v377 = vsub.f32 %v59, %v376
    %378 = vmatpush1.msra.mxu0 %v377
    %379 = vmatprep.subr.mxu0 0.0
    %v380 = vand.u32 %v60, 4294901760
    %v381 = vsub.f32 %v60, %v380
    %382 = vmatpush1.msra.mxu0 %v381
    %383 = vmatprep.subr.mxu0 0.0
    %384 = vmatpush1.msra.mxu0 0.0
    %385 = vmatprep.subr.mxu0 0.0
    %386 = vmatpush1.msra.mxu0 0.0
    %387 = vmatprep.subr.mxu0 0.0
    %388 = vmatpush1.msra.mxu0 0.0
    %389 = vmatprep.subr.mxu0 0.0
    %390 = vmatpush1.msra.mxu0 0.0
    %391 = vmatprep.subr.mxu0 0.0
    %392 = vmatpush1.msra.mxu0 0.0
    %393 = vmatprep.subr.mxu0 0.0
    %394 = vmatpush1.msra.mxu0 0.0
    %395 = vmatprep.subr.mxu0 0.0
    %396 = vmatpush1.msra.mxu0 0.0
    %397 = vmatprep.subr.mxu0 0.0
    %398 = vmatpush1.msra.mxu0 0.0
    %399 = vmatprep.subr.mxu0 0.0
    %400 = vmatpush1.msra.mxu0 0.0
    %401 = vmatprep.subr.mxu0 0.0
    %402 = vmatpush1.msra.mxu0 0.0
    %403 = vmatprep.subr.mxu0 0.0
    %404 = vmatpush1.msra.mxu0 0.0
    %405 = vmatprep.subr.mxu0 0.0
    %406 = vmatpush1.msra.mxu0 0.0
    %407 = vmatprep.subr.mxu0 0.0
    %408 = vmatpush1.msra.mxu0 0.0
    %409 = vmatprep.subr.mxu0 0.0
    %410 = vmatpush1.msra.mxu0 0.0
    %411 = vmatprep.subr.mxu0 0.0
    %412 = vmatpush1.msra.mxu0 0.0
    %413 = vmatprep.subr.mxu0 0.0
    %414 = vmatpush1.msra.mxu0 0.0
    %415 = vmatprep.mubr.f32.mxu0 0.0
    %v416 = vand.u32 %v43, 4294901760
    %v417 = vsub.f32 %v43, %v416
    %418 = vmatmul.mubr.f32.gmra.mrb[0].mxu0 %v417
    %v419 = vpop.f32.mrb[0].mxu0
    %v420 = vadd.f32 %v310, %v419
    %v421 = vpop.f32.mrb[0].mxu0
    %422 = vmatprep.mubr.f32.mxu0 0.0
    %v423 = vand.u32 %v44, 4294901760
    %v424 = vsub.f32 %v44, %v423
    %425 = vmatmul.mubr.f32.gmra.mrb[0].mxu0 %v424
    %v426 = vpop.f32.mrb[0].mxu0
    %v427 = vadd.f32 %v316, %v426
    %v428 = vpop.f32.mrb[0].mxu0
    %429 = vdwg.mxu0
    %430 = vmatprep.subr.mxu0 0.0
    %v431 = vand.u32 %v45, 4294901760
    %432 = vmatpush1.msra.mxu0 %v431
    %433 = vmatprep.subr.mxu0 0.0
    %v434 = vand.u32 %v46, 4294901760
    %435 = vmatpush1.msra.mxu0 %v434
    %436 = vmatprep.subr.mxu0 0.0
    %v437 = vand.u32 %v47, 4294901760
    %438 = vmatpush1.msra.mxu0 %v437
    %439 = vmatprep.subr.mxu0 0.0
    %v440 = vand.u32 %v48, 4294901760
    %441 = vmatpush1.msra.mxu0 %v440
    %442 = vmatprep.subr.mxu0 0.0
    %v443 = vand.u32 %v49, 4294901760
    %444 = vmatpush1.msra.mxu0 %v443
    %445 = vmatprep.subr.mxu0 0.0
    %v446 = vand.u32 %v50, 4294901760
    %447 = vmatpush1.msra.mxu0 %v446
    %448 = vmatprep.subr.mxu0 0.0
    %v449 = vand.u32 %v51, 4294901760
    %450 = vmatpush1.msra.mxu0 %v449
    %451 = vmatprep.subr.mxu0 0.0
    %v452 = vand.u32 %v52, 4294901760
    %453 = vmatpush1.msra.mxu0 %v452
    %454 = vmatprep.subr.mxu0 0.0
    %v455 = vand.u32 %v53, 4294901760
    %456 = vmatpush1.msra.mxu0 %v455
    %457 = vmatprep.subr.mxu0 0.0
    %v458 = vand.u32 %v54, 4294901760
    %459 = vmatpush1.msra.mxu0 %v458
    %460 = vmatprep.subr.mxu0 0.0
    %v461 = vand.u32 %v55, 4294901760
    %462 = vmatpush1.msra.mxu0 %v461
    %463 = vmatprep.subr.mxu0 0.0
    %v464 = vand.u32 %v56, 4294901760
    %465 = vmatpush1.msra.mxu0 %v464
    %466 = vmatprep.subr.mxu0 0.0
    %v467 = vand.u32 %v57, 4294901760
    %468 = vmatpush1.msra.mxu0 %v467
    %469 = vmatprep.subr.mxu0 0.0
    %v470 = vand.u32 %v58, 4294901760
    %471 = vmatpush1.msra.mxu0 %v470
    %472 = vmatprep.subr.mxu0 0.0
    %v473 = vand.u32 %v59, 4294901760
    %474 = vmatpush1.msra.mxu0 %v473
    %475 = vmatprep.subr.mxu0 0.0
    %v476 = vand.u32 %v60, 4294901760
    %477 = vmatpush1.msra.mxu0 %v476
    %478 = vmatprep.subr.mxu0 0.0
    %479 = vmatpush1.msra.mxu0 0.0
    %480 = vmatprep.subr.mxu0 0.0
    %481 = vmatpush1.msra.mxu0 0.0
    %482 = vmatprep.subr.mxu0 0.0
    %483 = vmatpush1.msra.mxu0 0.0
    %484 = vmatprep.subr.mxu0 0.0
    %485 = vmatpush1.msra.mxu0 0.0
    %486 = vmatprep.subr.mxu0 0.0
    %487 = vmatpush1.msra.mxu0 0.0
    %488 = vmatprep.subr.mxu0 0.0
    %489 = vmatpush1.msra.mxu0 0.0
    %490 = vmatprep.subr.mxu0 0.0
    %491 = vmatpush1.msra.mxu0 0.0
    %492 = vmatprep.subr.mxu0 0.0
    %493 = vmatpush1.msra.mxu0 0.0
    %494 = vmatprep.subr.mxu0 0.0
    %495 = vmatpush1.msra.mxu0 0.0
    %496 = vmatprep.subr.mxu0 0.0
    %497 = vmatpush1.msra.mxu0 0.0
    %498 = vmatprep.subr.mxu0 0.0
    %499 = vmatpush1.msra.mxu0 0.0
    %500 = vmatprep.subr.mxu0 0.0
    %501 = vmatpush1.msra.mxu0 0.0
    %502 = vmatprep.subr.mxu0 0.0
    %503 = vmatpush1.msra.mxu0 0.0
    %504 = vmatprep.subr.mxu0 0.0
    %505 = vmatpush1.msra.mxu0 0.0
    %506 = vmatprep.subr.mxu0 0.0
    %507 = vmatpush1.msra.mxu0 0.0
    %508 = vmatprep.subr.mxu0 0.0
    %509 = vmatpush1.msra.mxu0 0.0
    %510 = vmatprep.mubr.f32.mxu0 0.0
    %v511 = vand.u32 %v43, 4294901760
    %v512 = vsub.f32 %v43, %v511
    %v513 = vand.u32 %v512, 4294901760
    %514 = vmatmul.mubr.f32.gmra.mrb[0].mxu0 %v513
    %v515 = vpop.f32.mrb[0].mxu0
    %v516 = vadd.f32 %v420, %v515
    %v517 = vpop.f32.mrb[0].mxu0
    %518 = vmatprep.mubr.f32.mxu0 0.0
    %v519 = vand.u32 %v44, 4294901760
    %v520 = vsub.f32 %v44, %v519
    %v521 = vand.u32 %v520, 4294901760
    %522 = vmatmul.mubr.f32.gmra.mrb[0].mxu0 %v521
    %v523 = vpop.f32.mrb[0].mxu0
    %v524 = vadd.f32 %v427, %v523
    %v525 = vpop.f32.mrb[0].mxu0
    %526 = vdwg.mxu0
    %527 = vmatprep.subr.mxu0 0.0
    %v528 = vand.u32 %v45, 4294901760
    %v529 = vsub.f32 %v45, %v528
    %v530 = vand.u32 %v529, 4294901760
    %531 = vmatpush1.msra.mxu0 %v530
    %532 = vmatprep.subr.mxu0 0.0
    %v533 = vand.u32 %v46, 4294901760
    %v534 = vsub.f32 %v46, %v533
    %v535 = vand.u32 %v534, 4294901760
    %536 = vmatpush1.msra.mxu0 %v535
    %537 = vmatprep.subr.mxu0 0.0
    %v538 = vand.u32 %v47, 4294901760
    %v539 = vsub.f32 %v47, %v538
    %v540 = vand.u32 %v539, 4294901760
    %541 = vmatpush1.msra.mxu0 %v540
    %542 = vmatprep.subr.mxu0 0.0
    %v543 = vand.u32 %v48, 4294901760
    %v544 = vsub.f32 %v48, %v543
    %v545 = vand.u32 %v544, 4294901760
    %546 = vmatpush1.msra.mxu0 %v545
    %547 = vmatprep.subr.mxu0 0.0
    %v548 = vand.u32 %v49, 4294901760
    %v549 = vsub.f32 %v49, %v548
    %v550 = vand.u32 %v549, 4294901760
    %551 = vmatpush1.msra.mxu0 %v550
    %552 = vmatprep.subr.mxu0 0.0
    %v553 = vand.u32 %v50, 4294901760
    %v554 = vsub.f32 %v50, %v553
    %v555 = vand.u32 %v554, 4294901760
    %556 = vmatpush1.msra.mxu0 %v555
    %557 = vmatprep.subr.mxu0 0.0
    %v558 = vand.u32 %v51, 4294901760
    %v559 = vsub.f32 %v51, %v558
    %v560 = vand.u32 %v559, 4294901760
    %561 = vmatpush1.msra.mxu0 %v560
    %562 = vmatprep.subr.mxu0 0.0
    %v563 = vand.u32 %v52, 4294901760
    %v564 = vsub.f32 %v52, %v563
    %v565 = vand.u32 %v564, 4294901760
    %566 = vmatpush1.msra.mxu0 %v565
    %567 = vmatprep.subr.mxu0 0.0
    %v568 = vand.u32 %v53, 4294901760
    %v569 = vsub.f32 %v53, %v568
    %v570 = vand.u32 %v569, 4294901760
    %571 = vmatpush1.msra.mxu0 %v570
    %572 = vmatprep.subr.mxu0 0.0
    %v573 = vand.u32 %v54, 4294901760
    %v574 = vsub.f32 %v54, %v573
    %v575 = vand.u32 %v574, 4294901760
    %576 = vmatpush1.msra.mxu0 %v575
    %577 = vmatprep.subr.mxu0 0.0
    %v578 = vand.u32 %v55, 4294901760
    %v579 = vsub.f32 %v55, %v578
    %v580 = vand.u32 %v579, 4294901760
    %581 = vmatpush1.msra.mxu0 %v580
    %582 = vmatprep.subr.mxu0 0.0
    %v583 = vand.u32 %v56, 4294901760
    %v584 = vsub.f32 %v56, %v583
    %v585 = vand.u32 %v584, 4294901760
    %586 = vmatpush1.msra.mxu0 %v585
    %587 = vmatprep.subr.mxu0 0.0
    %v588 = vand.u32 %v57, 4294901760
    %v589 = vsub.f32 %v57, %v588
    %v590 = vand.u32 %v589, 4294901760
    %591 = vmatpush1.msra.mxu0 %v590
    %592 = vmatprep.subr.mxu0 0.0
    %v593 = vand.u32 %v58, 4294901760
    %v594 = vsub.f32 %v58, %v593
    %v595 = vand.u32 %v594, 4294901760
    %596 = vmatpush1.msra.mxu0 %v595
    %597 = vmatprep.subr.mxu0 0.0
    %v598 = vand.u32 %v59, 4294901760
    %v599 = vsub.f32 %v59, %v598
    %v600 = vand.u32 %v599, 4294901760
    %601 = vmatpush1.msra.mxu0 %v600
    %602 = vmatprep.subr.mxu0 0.0
    %v603 = vand.u32 %v60, 4294901760
    %v604 = vsub.f32 %v60, %v603
    %v605 = vand.u32 %v604, 4294901760
    %606 = vmatpush1.msra.mxu0 %v605
    %607 = vmatprep.subr.mxu0 0.0
    %608 = vmatpush1.msra.mxu0 0.0
    %609 = vmatprep.subr.mxu0 0.0
    %610 = vmatpush1.msra.mxu0 0.0
    %611 = vmatprep.subr.mxu0 0.0
    %612 = vmatpush1.msra.mxu0 0.0
    %613 = vmatprep.subr.mxu0 0.0
    %614 = vmatpush1.msra.mxu0 0.0
    %615 = vmatprep.subr.mxu0 0.0
    %616 = vmatpush1.msra.mxu0 0.0
    %617 = vmatprep.subr.mxu0 0.0
    %618 = vmatpush1.msra.mxu0 0.0
    %619 = vmatprep.subr.mxu0 0.0
    %620 = vmatpush1.msra.mxu0 0.0
    %621 = vmatprep.subr.mxu0 0.0
    %622 = vmatpush1.msra.mxu0 0.0
    %623 = vmatprep.subr.mxu0 0.0
    %624 = vmatpush1.msra.mxu0 0.0
    %625 = vmatprep.subr.mxu0 0.0
    %626 = vmatpush1.msra.mxu0 0.0
    %627 = vmatprep.subr.mxu0 0.0
    %628 = vmatpush1.msra.mxu0 0.0
    %629 = vmatprep.subr.mxu0 0.0
    %630 = vmatpush1.msra.mxu0 0.0
    %631 = vmatprep.subr.mxu0 0.0
    %632 = vmatpush1.msra.mxu0 0.0
    %633 = vmatprep.subr.mxu0 0.0
    %634 = vmatpush1.msra.mxu0 0.0
    %635 = vmatprep.subr.mxu0 0.0
    %636 = vmatpush1.msra.mxu0 0.0
    %637 = vmatprep.subr.mxu0 0.0
    %638 = vmatpush1.msra.mxu0 0.0
    %639 = vmatprep.mubr.f32.mxu0 0.0
    %v640 = vand.u32 %v43, 4294901760
    %641 = vmatmul.mubr.f32.gmra.mrb[0].mxu0 %v640
    %v642 = vpop.f32.mrb[0].mxu0
    %v643 = vadd.f32 %v516, %v642
    %v644 = vpop.f32.mrb[0].mxu0
    %645 = vmatprep.mubr.f32.mxu0 0.0
    %v646 = vand.u32 %v44, 4294901760
    %647 = vmatmul.mubr.f32.gmra.mrb[0].mxu0 %v646
    %v648 = vpop.f32.mrb[0].mxu0
    %v649 = vadd.f32 %v524, %v648
    %v650 = vpop.f32.mrb[0].mxu0
    %651 = vdwg.mxu0
    %652 = vmatprep.subr.mxu0 0.0
    %v653 = vand.u32 %v45, 4294901760
    %654 = vmatpush1.msra.mxu0 %v653
    %655 = vmatprep.subr.mxu0 0.0
    %v656 = vand.u32 %v46, 4294901760
    %657 = vmatpush1.msra.mxu0 %v656
    %658 = vmatprep.subr.mxu0 0.0
    %v659 = vand.u32 %v47, 4294901760
    %660 = vmatpush1.msra.mxu0 %v659
    %661 = vmatprep.subr.mxu0 0.0
    %v662 = vand.u32 %v48, 4294901760
    %663 = vmatpush1.msra.mxu0 %v662
    %664 = vmatprep.subr.mxu0 0.0
    %v665 = vand.u32 %v49, 4294901760
    %666 = vmatpush1.msra.mxu0 %v665
    %667 = vmatprep.subr.mxu0 0.0
    %v668 = vand.u32 %v50, 4294901760
    %669 = vmatpush1.msra.mxu0 %v668
    %670 = vmatprep.subr.mxu0 0.0
    %v671 = vand.u32 %v51, 4294901760
    %672 = vmatpush1.msra.mxu0 %v671
    %673 = vmatprep.subr.mxu0 0.0
    %v674 = vand.u32 %v52, 4294901760
    %675 = vmatpush1.msra.mxu0 %v674
    %676 = vmatprep.subr.mxu0 0.0
    %v677 = vand.u32 %v53, 4294901760
    %678 = vmatpush1.msra.mxu0 %v677
    %679 = vmatprep.subr.mxu0 0.0
    %v680 = vand.u32 %v54, 4294901760
    %681 = vmatpush1.msra.mxu0 %v680
    %682 = vmatprep.subr.mxu0 0.0
    %v683 = vand.u32 %v55, 4294901760
    %684 = vmatpush1.msra.mxu0 %v683
    %685 = vmatprep.subr.mxu0 0.0
    %v686 = vand.u32 %v56, 4294901760
    %687 = vmatpush1.msra.mxu0 %v686
    %688 = vmatprep.subr.mxu0 0.0
    %v689 = vand.u32 %v57, 4294901760
    %690 = vmatpush1.msra.mxu0 %v689
    %691 = vmatprep.subr.mxu0 0.0
    %v692 = vand.u32 %v58, 4294901760
    %693 = vmatpush1.msra.mxu0 %v692
    %694 = vmatprep.subr.mxu0 0.0
    %v695 = vand.u32 %v59, 4294901760
    %696 = vmatpush1.msra.mxu0 %v695
    %697 = vmatprep.subr.mxu0 0.0
    %v698 = vand.u32 %v60, 4294901760
    %699 = vmatpush1.msra.mxu0 %v698
    %700 = vmatprep.subr.mxu0 0.0
    %701 = vmatpush1.msra.mxu0 0.0
    %702 = vmatprep.subr.mxu0 0.0
    %703 = vmatpush1.msra.mxu0 0.0
    %704 = vmatprep.subr.mxu0 0.0
    %705 = vmatpush1.msra.mxu0 0.0
    %706 = vmatprep.subr.mxu0 0.0
    %707 = vmatpush1.msra.mxu0 0.0
    %708 = vmatprep.subr.mxu0 0.0
    %709 = vmatpush1.msra.mxu0 0.0
    %710 = vmatprep.subr.mxu0 0.0
    %711 = vmatpush1.msra.mxu0 0.0
    %712 = vmatprep.subr.mxu0 0.0
    %713 = vmatpush1.msra.mxu0 0.0
    %714 = vmatprep.subr.mxu0 0.0
    %715 = vmatpush1.msra.mxu0 0.0
    %716 = vmatprep.subr.mxu0 0.0
    %717 = vmatpush1.msra.mxu0 0.0
    %718 = vmatprep.subr.mxu0 0.0
    %719 = vmatpush1.msra.mxu0 0.0
    %720 = vmatprep.subr.mxu0 0.0
    %721 = vmatpush1.msra.mxu0 0.0
    %722 = vmatprep.subr.mxu0 0.0
    %723 = vmatpush1.msra.mxu0 0.0
    %724 = vmatprep.subr.mxu0 0.0
    %725 = vmatpush1.msra.mxu0 0.0
    %726 = vmatprep.subr.mxu0 0.0
    %727 = vmatpush1.msra.mxu0 0.0
    %728 = vmatprep.subr.mxu0 0.0
    %729 = vmatpush1.msra.mxu0 0.0
    %730 = vmatprep.subr.mxu0 0.0
    %731 = vmatpush1.msra.mxu0 0.0
    %732 = vmatprep.mubr.f32.mxu0 0.0
    %v733 = vand.u32 %v43, 4294901760
    %734 = vmatmul.mubr.f32.gmra.mrb[0].mxu0 %v733
    %v735 = vpop.f32.mrb[0].mxu0
    %v736 = vadd.f32 %v643, %v735
    %v737 = vpop.f32.mrb[0].mxu0
    %738 = vmatprep.mubr.f32.mxu0 0.0
    %v739 = vand.u32 %v44, 4294901760
    %740 = vmatmul.mubr.f32.gmra.mrb[0].mxu0 %v739
    %v741 = vpop.f32.mrb[0].mxu0
    %v742 = vadd.f32 %v649, %v741
    %v743 = vpop.f32.mrb[0].mxu0
    %744 = vdwg.mxu0
    %p745 = scmp.eq.s32.totalorder 0, 0
    // Predicated region
    $region22: #{tpu_custom_call.1} parent=1 // pred_check
      %p746 = pneg %p745
    $region23: #{tpu_custom_call.1} parent=1 // pred_check_branch
      %748 = sbr.rel (%p746) target = $region25
    $region24: #{tpu_custom_call.1} parent=1 // pred_region
      %v749 = vld [vmem:[%s2] sm:$0x1]
      %v751 = vlaneseq
      %v752 = vshrl.u32 %v751, 7
      %v753 = vsub.s32 0, %v752
      %v754 = vrot.slane %v749, %v753
      %v756 = vadd.f32 %v736, %v754
      %v757 = vadd.f32 %v742, %v754
      %758 = vst [vmem:[#allocation7] sm:$0xff] %v756
      %759 = vst [vmem:[#allocation7 + $0x8] sm:$0xff] %v757
    $region25: #{tpu_custom_call.1} parent=1 // pred_fallthru
      _
    %p760 = scmp.ne.s32.totalorder 0, 0
    // Predicated region
    $region26: #{tpu_custom_call.1} parent=1 // pred_check
      %p761 = pneg %p760
    $region27: #{tpu_custom_call.1} parent=1 // pred_check_branch
      %763 = sbr.rel (%p761) target = $region29
    $region28: #{tpu_custom_call.1} parent=1 // pred_region
      %v764 = vld [vmem:[#allocation7] sm:$0xff]
      %v765 = vld [vmem:[#allocation7 + $0x8] sm:$0xff]
      %v766 = vadd.f32 %v764, %v736
      %v767 = vadd.f32 %v765, %v742
      %768 = vst [vmem:[#allocation7] sm:$0xff] %v766
      %769 = vst [vmem:[#allocation7 + $0x8] sm:$0xff] %v767
    $region29: #{tpu_custom_call.1} parent=1 // pred_fallthru
      _
    // Predicated region
    $region30: #{tpu_custom_call.1} parent=1 // pred_check
      _
    $region31: #{tpu_custom_call.1} parent=1 // pred_check_branch
      %771 = sbr.rel (0) target = $region33
    $region32: #{tpu_custom_call.1} parent=1 // pred_region
      %s773 = ssub.s32 256, 256
      %774 = vsyncadd [#allocation4], %s773
      %s775 = sshll.u32 [#allocation7], 4
      %s776 = int_to_ptr.vmem [resolvable:$true] %s775
      %781 = dma.vmem_to_hbm [thread:$0]  %s776, 256, %s3, [#allocation4], 128, 128, 8
    $region33: #{tpu_custom_call.1} parent=1 // pred_fallthru
      _
    // Predicated region
    $region34: #{tpu_custom_call.1} parent=1 // pred_check
      _
    $region35: #{tpu_custom_call.1} parent=1 // pred_check_branch
      %783 = sbr.rel (0) target = $region37
    $region36: #{tpu_custom_call.1} parent=1 // pred_region
      %784 = dma.done [#allocation4], 256
    $region37: #{tpu_custom_call.1} parent=1 // pred_fallthru
      _
    %785 = vsyncpa [#allocation3], 1
    %786 = vsyncpa [#allocation6], 1
    %787 = vsyncpa [#allocation4], 1

</llo_original>
